<compile_context>
chip_gen: v7x
topology: tpu7x:2x2x1
jax: 0.10.0
libtpu: 0.0.40
codegen_flags: <defaults>
</compile_context>

<pallas_src>
import jax
import jax.numpy as jnp
from jax import lax
from jax.experimental import pallas as pl
from jax.experimental.pallas import tpu as pltpu


TEMPERATURE = 0.1            # ContrastiveLoss.__init__ default (static)
MXU_DTYPE = jnp.float32      # flip to jnp.bfloat16 only if the 1e-4 tolerance
                             # against the f32 reference is relaxed


def _pick_tile(n, target, steps=(128, 8)):
    """Largest tile <= target dividing n, preferring lane-dense multiples of
    128, then sublane multiples of 8; falls back to the full dimension."""
    if n <= target:
        return n
    for step in steps:
        t = (target // step) * step
        while t >= step:
            if n % t == 0:
                return t
            t -= step
    return n


# ---------------------------------------------------------------------------
# Pass 1: per-row L2 normalization (done ONCE) + analytic positive pairs.
# Reads z_i and z_j directly (no HBM concat round trip).  Pass-1 work is
# O(n*d) and tiny next to pass 2, so its <=50%-lane d=64 accesses are left
# alone on purpose (per review).
# ---------------------------------------------------------------------------
def _prep_kernel(zi_ref, zj_ref, rn_ref, pos_ref):
    zi = zi_ref[...].astype(jnp.float32)
    zj = zj_ref[...].astype(jnp.float32)
    # torch.nn.functional.normalize(dim=1): x / max(||x||_2, eps), eps = 1e-12
    ni = zi / jnp.maximum(jnp.sqrt(jnp.sum(zi * zi, axis=1, keepdims=True)),
                          jnp.float32(1e-12))
    nj = zj / jnp.maximum(jnp.sqrt(jnp.sum(zj * zj, axis=1, keepdims=True)),
                          jnp.float32(1e-12))
    rn_ref[0, :, :] = ni.astype(rn_ref.dtype)
    rn_ref[1, :, :] = nj.astype(rn_ref.dtype)
    # Analytic positive term: sum_b <rn_i[b], rn_j[b]> for this batch block
    # (replaces any O(n^2) partner mask entirely).
    pos_ref[...] = jnp.full(pos_ref.shape, jnp.sum(ni * nj), dtype=pos_ref.dtype)


# ---------------------------------------------------------------------------
# Pass 2: flash-style tiled online logsumexp over the [n, n] similarities.
# Q block resident across the key axis; K streamed as pre-transposed (d, tk).
# ---------------------------------------------------------------------------
def _make_ntxent_kernel(tq, tk, inv_temp):
    inv_temp = float(inv_temp)

    def kernel(q_ref, k_ref, out_ref, m_scr, l_scr):
        qi = pl.program_id(0)
        ki = pl.program_id(1)
        nk = pl.num_programs(1)

        @pl.when(ki == 0)
        def _init():
            m_scr[...] = jnp.full_like(m_scr, -1e30)
            l_scr[...] = jnp.zeros_like(l_scr)

        # Fold 1/T into the (tq, d) query tile (tq*d multiplies, not tq*tk)
        # and hit the MXU with a native (tq, d) x (d, tk) contraction: the key
        # tile is already transposed, so no per-tile RHS relayout.
        q = q_ref[0].astype(jnp.float32) * jnp.float32(inv_temp)
        k = k_ref[0].astype(jnp.float32)
        s = lax.dot_general(q, k,
                            dimension_numbers=(((1,), (0,)), ((), ())),
                            preferred_element_type=jnp.float32)

        def online_update(scores):
            # (tq, 1) running stats; tiny next to the (tq, tk) tile work.
            m_prev = m_scr[...]
            m_new = jnp.maximum(m_prev, jnp.max(scores, axis=1, keepdims=True))
            alpha = jnp.exp(m_prev - m_new)
            l_scr[...] = alpha * l_scr[...] + jnp.sum(
                jnp.exp(scores - m_new), axis=1, keepdims=True)
            m_scr[...] = m_new

        q_start = qi * tq
        k_start = ki * tk
        # The self-similarity diagonal crosses this tile iff the global row
        # range intersects the global column range.
        has_diag = jnp.logical_and(q_start < k_start + tk, k_start < q_start + tq)

        @pl.when(has_diag)
        def _masked_update():
            # global_row == global_col  <=>  local_r - local_c == k_start - q_start
            delta = (lax.broadcasted_iota(jnp.int32, (tq, tk), 0)
                     - lax.broadcasted_iota(jnp.int32, (tq, tk), 1))
            online_update(jnp.where(delta == (k_start - q_start),
                                    jnp.float32(-1e30), s))

        @pl.when(jnp.logical_not(has_diag))
        def _plain_update():
            online_update(s)

        @pl.when(ki == nk - 1)
        def _finalize():
            # Sum of logsumexp_{j != i} S_ij over this query block's rows,
            # written once as a lane-dense (1, 8, 128) splat.
            lse = m_scr[...] + jnp.log(l_scr[...])
            out_ref[...] = jnp.full(out_ref.shape, jnp.sum(lse), dtype=out_ref.dtype)

    return kernel


def _pass2_vmem_limit(tq, tk, d):
    # ~4 live (tq, tk) word-sized temporaries (scores / iotas / mask / exp),
    # double-buffered Q and K tiles, plus slack -- well under v7x's 64 MiB.
    tile_bytes = 4 * (4 * tq * tk + 4 * (tq + tk) * d)
    return int(min(max(tile_bytes + (8 << 20), 16 << 20), 64 << 20))


def contrastive_loss(z_i, z_j, temperature=TEMPERATURE, tq=None, tk=None):
    """NT-Xent loss matching ContrastiveLoss.forward(z_i, z_j)."""
    b, d = z_i.shape
    assert z_j.shape == (b, d)
    n = 2 * b

    # ---- pass 1: normalize each row once + positive-pair dot products ------
    tb = _pick_tile(b, 256)
    nb = b // tb
    rn3, pos_part = pl.pallas_call(
        _prep_kernel,
        out_shape=(jax.ShapeDtypeStruct((2, b, d), MXU_DTYPE),
                   jax.ShapeDtypeStruct((nb, 8, 128), jnp.float32)),
        grid_spec=pltpu.PrefetchScalarGridSpec(
            num_scalar_prefetch=0,
            grid=(nb,),
            in_specs=[pl.BlockSpec((tb, d), lambda i: (i, 0)),
                      pl.BlockSpec((tb, d), lambda i: (i, 0))],
            out_specs=(pl.BlockSpec((2, tb, d), lambda i: (0, i, 0)),
                       pl.BlockSpec((1, 8, 128), lambda i: (i, 0, 0)))),
        compiler_params=pltpu.CompilerParams(
            dimension_semantics=("parallel",)),
    )(z_i, z_j)
    pos_sum = jnp.sum(pos_part[:, 0, 0])          # sum_b <rn_i[b], rn_j[b]>

    # One-time O(n*d) transposed copy so pass 2's K tile is already (d, tk);
    # cost is amortized over the n/tq full key re-reads.
    # TODO(synk): fold this transpose into pass 1 once in-kernel 2-D
    # transposes of (tb, d=64) f32 tiles are verified on the target toolchain.
    rn_t = jnp.swapaxes(rn3, 1, 2)                # (2, d, b)

    # ---- pass 2: tiled online logsumexp over the n x n similarities --------
    # tq is the primary knob: K HBM traffic = (n/tq) * n * d * 4 bytes.
    # Defaults (tq<=512, tk<=2048) fit v7x's 64 MiB VMEM; on v5e/v6e (128 MiB)
    # tq=1024 is a valid override for large batches.
    tq = tq if tq is not None else _pick_tile(b, 512)
    tk = tk if tk is not None else _pick_tile(b, 2048, steps=(128,))
    if b % tq or b % tk:
        raise ValueError(f"tq={tq} and tk={tk} must divide the batch size {b}")
    assert tk % 128 == 0 or tk == b, "tk should be lane-dense (x128) or the full half"
    qpb, kpb = b // tq, b // tk                   # blocks per half
    nq, nk = 2 * qpb, 2 * kpb                     # nq >= 2 keeps both v7x TCs busy

    kern = _make_ntxent_kernel(tq, tk, 1.0 / float(temperature))
    lse_part = pl.pallas_call(
        kern,
        out_shape=jax.ShapeDtypeStruct((nq, 8, 128), jnp.float32),
        grid_spec=pltpu.PrefetchScalarGridSpec(
            num_scalar_prefetch=0,
            grid=(nq, nk),
            in_specs=[
                # Q block (tq, d): resident across the key axis.
                pl.BlockSpec((1, tq, d), lambda i, j: (i // qpb, i % qpb, 0)),
                # K block (d, tk): pre-transposed, streamed along the key axis.
                pl.BlockSpec((1, d, tk), lambda i, j: (j // kpb, 0, j % kpb)),
            ],
            out_specs=pl.BlockSpec((1, 8, 128), lambda i, j: (i, 0, 0)),
            scratch_shapes=[pltpu.VMEM((tq, 1), jnp.float32),     # running max
                            pltpu.VMEM((tq, 1), jnp.float32)]),   # running sum
        compiler_params=pltpu.CompilerParams(
            dimension_semantics=("parallel", "arbitrary"),
            vmem_limit_bytes=_pass2_vmem_limit(tq, tk, d)),
    )(rn3, rn_t)
    lse_sum = jnp.sum(lse_part[:, 0, 0])

    # loss = mean_i( logsumexp_{j != i} S_ij  -  S_{i, partner(i)} )
    return lse_sum / n - pos_sum / (b * float(temperature))


def _reference_loss(z_i, z_j, temperature=TEMPERATURE):
    # Pure-JAX reference mirroring the PyTorch forward exactly.
    b = z_i.shape[0]
    r = jnp.concatenate([z_i, z_j], axis=0).astype(jnp.float32)
    r = r / jnp.maximum(jnp.linalg.norm(r, axis=1, keepdims=True), 1e-12)
    s = (r @ r.T) / temperature
    n = 2 * b
    idx = jnp.arange(n)
    lse = jax.nn.logsumexp(jnp.where(idx[None, :] == idx[:, None], -jnp.inf, s), axis=1)
    pos = s[idx, (idx + b) % n]
    return jnp.mean(lse - pos)


if __name__ == "__main__":
    key = jax.random.PRNGKey(0)
    k1, k2 = jax.random.split(key)

    # Multi-block case: n = 512 rows, d = 64 (SmartDetector's projection dim).
    # Forced tiles exercise multiple blocks per half on both axes (qpb=4,
    # kpb=2), a lane-dense tk=128, the online-lse carry, the diagonal-tile
    # gating and the megacore-parallel row axis.
    B, D = 256, 64
    z_i = jax.random.normal(k1, (B, D), dtype=jnp.float32)
    z_j = jax.random.normal(k2, (B, D), dtype=jnp.float32)
    loss = jax.block_until_ready(contrastive_loss(z_i, z_j, tq=64, tk=128))
    ref = _reference_loss(z_i, z_j)
    assert jnp.allclose(loss, ref, atol=1e-4, rtol=1e-4), (loss, ref)

    # Default-tile path at a tiny shape (single block per half).
    k3, k4 = jax.random.split(k2)
    z_i2 = jax.random.normal(k3, (8, 64), dtype=jnp.float32)
    z_j2 = jax.random.normal(k4, (8, 64), dtype=jnp.float32)
    loss2 = jax.block_until_ready(contrastive_loss(z_i2, z_j2))
    ref2 = _reference_loss(z_i2, z_j2)
    assert jnp.allclose(loss2, ref2, atol=1e-4, rtol=1e-4), (loss2, ref2)

    print("KERNEL_OK")
</pallas_src>

<mosaic_0001>
module attributes {stable_mosaic.version = 11 : i64} {
  func.func @_prep_kernel(%arg0: i32, %arg1: memref<256x64xf32, #tpu.memory_space<vmem>>, %arg2: memref<256x64xf32, #tpu.memory_space<vmem>>, %arg3: memref<2x256x64xf32, #tpu.memory_space<vmem>>, %arg4: memref<1x8x128xf32, #tpu.memory_space<vmem>>) attributes {dimension_semantics = [#tpu.dimension_semantics<parallel>], iteration_bounds = array<i64: 1>, scalar_prefetch = 0 : i64, scratch_operands = 0 : i64, tpu.core_type = #tpu.core_type<tc>, window_params = [{transform_indices = @transform_0, window_bounds = array<i64: 256, 64>}, {transform_indices = @transform_1, window_bounds = array<i64: 256, 64>}, {transform_indices = @transform_2, window_bounds = array<i64: 2, 256, 64>}, {transform_indices = @transform_3, window_bounds = array<i64: 1, 8, 128>}]} {
    %c0 = arith.constant 0 : index
    %c0_0 = arith.constant 0 : index
    %0 = vector.load %arg1[%c0, %c0_0] : memref<256x64xf32, #tpu.memory_space<vmem>>, vector<256x64xf32>
    %c0_1 = arith.constant 0 : index
    %c0_2 = arith.constant 0 : index
    %1 = vector.load %arg2[%c0_1, %c0_2] : memref<256x64xf32, #tpu.memory_space<vmem>>, vector<256x64xf32>
    %2 = arith.mulf %0, %0 : vector<256x64xf32>
    %cst = arith.constant dense<0.000000e+00> : vector<256xf32>
    %3 = vector.multi_reduction <add>, %2, %cst [1] : vector<256x64xf32> to vector<256xf32>
    %4 = vector.shape_cast %3 : vector<256xf32> to vector<256x1xf32>
    %5 = math.sqrt %4 : vector<256x1xf32>
    %cst_3 = arith.constant 9.99999996E-13 : f32
    %6 = vector.broadcast %cst_3 : f32 to vector<256x1xf32>
    %7 = arith.maximumf %5, %6 : vector<256x1xf32>
    %8 = vector.broadcast %7 : vector<256x1xf32> to vector<256x64xf32>
    %9 = arith.divf %0, %8 : vector<256x64xf32>
    %10 = arith.mulf %1, %1 : vector<256x64xf32>
    %cst_4 = arith.constant dense<0.000000e+00> : vector<256xf32>
    %11 = vector.multi_reduction <add>, %10, %cst_4 [1] : vector<256x64xf32> to vector<256xf32>
    %12 = vector.shape_cast %11 : vector<256xf32> to vector<256x1xf32>
    %13 = math.sqrt %12 : vector<256x1xf32>
    %cst_5 = arith.constant 9.99999996E-13 : f32
    %14 = vector.broadcast %cst_5 : f32 to vector<256x1xf32>
    %15 = arith.maximumf %13, %14 : vector<256x1xf32>
    %16 = vector.broadcast %15 : vector<256x1xf32> to vector<256x64xf32>
    %17 = arith.divf %1, %16 : vector<256x64xf32>
    %c0_6 = arith.constant 0 : index
    %c0_7 = arith.constant 0 : index
    %c0_8 = arith.constant 0 : index
    %18 = vector.load %arg3[%c0_6, %c0_7, %c0_8] : memref<2x256x64xf32, #tpu.memory_space<vmem>>, vector<1x256x64xf32>
    %19 = vector.shape_cast %18 : vector<1x256x64xf32> to vector<256x64xf32>
    %20 = vector.shape_cast %9 : vector<256x64xf32> to vector<1x256x64xf32>
    tpu.vector_store %arg3[%c0_6, %c0_7, %c0_8], %20 {strides = array<i32>} : memref<2x256x64xf32, #tpu.memory_space<vmem>>, vector<1x256x64xf32>,
    %c1 = arith.constant 1 : index
    %c0_9 = arith.constant 0 : index
    %c0_10 = arith.constant 0 : index
    %21 = vector.load %arg3[%c1, %c0_9, %c0_10] : memref<2x256x64xf32, #tpu.memory_space<vmem>>, vector<1x256x64xf32>
    %22 = vector.shape_cast %21 : vector<1x256x64xf32> to vector<256x64xf32>
    %23 = vector.shape_cast %17 : vector<256x64xf32> to vector<1x256x64xf32>
    tpu.vector_store %arg3[%c1, %c0_9, %c0_10], %23 {strides = array<i32>} : memref<2x256x64xf32, #tpu.memory_space<vmem>>, vector<1x256x64xf32>,
    %24 = arith.mulf %9, %17 : vector<256x64xf32>
    %25 = vector.shape_cast %24 : vector<256x64xf32> to vector<1x256x64xf32>
    %cst_11 = arith.constant dense<0.000000e+00> : vector<1xf32>
    %26 = vector.multi_reduction <add>, %25, %cst_11 [1, 2] : vector<1x256x64xf32> to vector<1xf32>
    %27 = vector.shape_cast %26 : vector<1xf32> to vector<1x1x1xf32>
    %28 = vector.extract %27[0, 0, 0] : f32 from vector<1x1x1xf32>
    %29 = vector.broadcast %28 : f32 to vector<1x8x128xf32>
    %c0_12 = arith.constant 0 : index
    %c0_13 = arith.constant 0 : index
    %c0_14 = arith.constant 0 : index
    %30 = vector.load %arg4[%c0_12, %c0_13, %c0_14] : memref<1x8x128xf32, #tpu.memory_space<vmem>>, vector<1x8x128xf32>
    tpu.vector_store %arg4[%c0_12, %c0_13, %c0_14], %29 {strides = array<i32>} : memref<1x8x128xf32, #tpu.memory_space<vmem>>, vector<1x8x128xf32>,
    return
  }
  func.func @transform_0(%arg0: i32) -> (i32, i32) {
    %c0_i32 = arith.constant 0 : i32
    %c0_i32_0 = arith.constant 0 : i32
    return %arg0, %c0_i32 : i32, i32
  }
  func.func @transform_1(%arg0: i32) -> (i32, i32) {
    %c0_i32 = arith.constant 0 : i32
    %c0_i32_0 = arith.constant 0 : i32
    return %arg0, %c0_i32 : i32, i32
  }
  func.func @transform_2(%arg0: i32) -> (i32, i32, i32) {
    %c0_i32 = arith.constant 0 : i32
    %c0_i32_0 = arith.constant 0 : i32
    %c0_i32_1 = arith.constant 0 : i32
    return %c0_i32, %arg0, %c0_i32_0 : i32, i32, i32
  }
  func.func @transform_3(%arg0: i32) -> (i32, i32, i32) {
    %c0_i32 = arith.constant 0 : i32
    %c0_i32_0 = arith.constant 0 : i32
    %c0_i32_1 = arith.constant 0 : i32
    return %arg0, %c0_i32, %c0_i32_0 : i32, i32, i32
  }
}

</mosaic_0001>

<llo_original>
// kernel: tpu_custom_call.1
$region0: #{tpu_custom_call.1}
  #allocation0 [shape = 'u32[]', space=smem, size = 0x4, offset = 0x4, fixed_abs, tag = 'smem constant byte address 0x4 - core index']
  #allocation1 [shape = 'u32[144,128]{1,0:T(1,128)}', space=vmem, size = 0x12000, scoped, tag = 'internal scratch']
  %s0 = inlined_call_operand.vmem [shape: f32[256,64], index: 0, kind: input, shape index: {}]
  %s1 = inlined_call_operand.vmem [shape: f32[256,64], index: 1, kind: input, shape index: {}]
  %s2 = inlined_call_operand.vmem [shape: f32[2,256,64], index: 2, kind: output, shape index: {0}]
  %s3 = inlined_call_operand.hbm [shape: f32[1,8,128], index: 3, kind: output, shape index: {1}]
  %4 = xla_tuple %s2, %s3
  %s5 = sld [smem:[#allocation0]]
  $region26: #{tpu_custom_call.1} parent=0
    _
  %s7 = ssub.s32 1, %s5
  %s8 = scalar_select 0, %s7, %s5
  $region1: #{tpu_custom_call.1} parent=0
    #allocation2 [shape = 'u8[4096]{0}', space=vmem, size = 0x1000, scoped, tag = 'output window, operand 1, single buffered']
    #allocation3 [shape = 's32[1]{0}', space=sflag, size = 0x4, scoped, tag = 'scoped memory for tpu_custom_call.1']
    %9 = vsyncpa [#allocation3], 0
    // Predicated region
    $region2: #{tpu_custom_call.1} parent=1 // pred_check
      _
    $region3: #{tpu_custom_call.1} parent=1 // pred_check_branch
      %11 = sbr.rel (0) target = $region5
    $region4: #{tpu_custom_call.1} parent=1 // pred_region
      _
    $region5: #{tpu_custom_call.1} parent=1 // pred_fallthru
      _
    // Predicated region
    $region6: #{tpu_custom_call.1} parent=1 // pred_check
      _
    $region7: #{tpu_custom_call.1} parent=1 // pred_check_branch
      %13 = sbr.rel (0) target = $region9
    $region8: #{tpu_custom_call.1} parent=1 // pred_region
      _
    $region9: #{tpu_custom_call.1} parent=1 // pred_fallthru
      _
    %v14 = vld [vmem:[%s0] sm:$0xff]
    %v15 = vld [vmem:[%s0 + $0x8] sm:$0xff]
    %v16 = vld [vmem:[%s0 + $0x10] sm:$0xff]
    %v17 = vld [vmem:[%s0 + $0x18] sm:$0xff]
    %v18 = vld [vmem:[%s0 + $0x20] sm:$0xff]
    %v19 = vld [vmem:[%s0 + $0x28] sm:$0xff]
    %v20 = vld [vmem:[%s0 + $0x30] sm:$0xff]
    %v21 = vld [vmem:[%s0 + $0x38] sm:$0xff]
    %v22 = vld [vmem:[%s0 + $0x40] sm:$0xff]
    %v23 = vld [vmem:[%s0 + $0x48] sm:$0xff]
    %v24 = vld [vmem:[%s0 + $0x50] sm:$0xff]
    %v25 = vld [vmem:[%s0 + $0x58] sm:$0xff]
    %v26 = vld [vmem:[%s0 + $0x60] sm:$0xff]
    %v27 = vld [vmem:[%s0 + $0x68] sm:$0xff]
    %v28 = vld [vmem:[%s0 + $0x70] sm:$0xff]
    %v29 = vld [vmem:[%s0 + $0x78] sm:$0xff]
    %v30 = vld [vmem:[%s0 + $0x80] sm:$0xff]
    %v31 = vld [vmem:[%s0 + $0x88] sm:$0xff]
    %v32 = vld [vmem:[%s0 + $0x90] sm:$0xff]
    %v33 = vld [vmem:[%s0 + $0x98] sm:$0xff]
    %v34 = vld [vmem:[%s0 + $0xa0] sm:$0xff]
    %v35 = vld [vmem:[%s0 + $0xa8] sm:$0xff]
    %v36 = vld [vmem:[%s0 + $0xb0] sm:$0xff]
    %v37 = vld [vmem:[%s0 + $0xb8] sm:$0xff]
    %v38 = vld [vmem:[%s0 + $0xc0] sm:$0xff]
    %v39 = vld [vmem:[%s0 + $0xc8] sm:$0xff]
    %v40 = vld [vmem:[%s0 + $0xd0] sm:$0xff]
    %v41 = vld [vmem:[%s0 + $0xd8] sm:$0xff]
    %v42 = vld [vmem:[%s0 + $0xe0] sm:$0xff]
    %v43 = vld [vmem:[%s0 + $0xe8] sm:$0xff]
    %v44 = vld [vmem:[%s0 + $0xf0] sm:$0xff]
    %v45 = vld [vmem:[%s0 + $0xf8] sm:$0xff]
    %v46 = vld [vmem:[%s1] sm:$0xff]
    %v47 = vld [vmem:[%s1 + $0x8] sm:$0xff]
    %v48 = vld [vmem:[%s1 + $0x10] sm:$0xff]
    %v49 = vld [vmem:[%s1 + $0x18] sm:$0xff]
    %v50 = vld [vmem:[%s1 + $0x20] sm:$0xff]
    %v51 = vld [vmem:[%s1 + $0x28] sm:$0xff]
    %v52 = vld [vmem:[%s1 + $0x30] sm:$0xff]
    %v53 = vld [vmem:[%s1 + $0x38] sm:$0xff]
    %v54 = vld [vmem:[%s1 + $0x40] sm:$0xff]
    %v55 = vld [vmem:[%s1 + $0x48] sm:$0xff]
    %v56 = vld [vmem:[%s1 + $0x50] sm:$0xff]
    %v57 = vld [vmem:[%s1 + $0x58] sm:$0xff]
    %v58 = vld [vmem:[%s1 + $0x60] sm:$0xff]
    %v59 = vld [vmem:[%s1 + $0x68] sm:$0xff]
    %v60 = vld [vmem:[%s1 + $0x70] sm:$0xff]
    %v61 = vld [vmem:[%s1 + $0x78] sm:$0xff]
    %v62 = vld [vmem:[%s1 + $0x80] sm:$0xff]
    %v63 = vld [vmem:[%s1 + $0x88] sm:$0xff]
    %v64 = vld [vmem:[%s1 + $0x90] sm:$0xff]
    %v65 = vld [vmem:[%s1 + $0x98] sm:$0xff]
    %v66 = vld [vmem:[%s1 + $0xa0] sm:$0xff]
    %v67 = vld [vmem:[%s1 + $0xa8] sm:$0xff]
    %v68 = vld [vmem:[%s1 + $0xb0] sm:$0xff]
    %v69 = vld [vmem:[%s1 + $0xb8] sm:$0xff]
    %v70 = vld [vmem:[%s1 + $0xc0] sm:$0xff]
    %v71 = vld [vmem:[%s1 + $0xc8] sm:$0xff]
    %v72 = vld [vmem:[%s1 + $0xd0] sm:$0xff]
    %v73 = vld [vmem:[%s1 + $0xd8] sm:$0xff]
    %v74 = vld [vmem:[%s1 + $0xe0] sm:$0xff]
    %v75 = vld [vmem:[%s1 + $0xe8] sm:$0xff]
    %v76 = vld [vmem:[%s1 + $0xf0] sm:$0xff]
    %v77 = vld [vmem:[%s1 + $0xf8] sm:$0xff]
    %v78 = vmul.f32 %v14, %v14
    %v79 = vmul.f32 %v15, %v15
    %v80 = vmul.f32 %v16, %v16
    %v81 = vmul.f32 %v17, %v17
    %v82 = vmul.f32 %v18, %v18
    %v83 = vmul.f32 %v19, %v19
    %v84 = vmul.f32 %v20, %v20
    %v85 = vmul.f32 %v21, %v21
    %v86 = vmul.f32 %v22, %v22
    %v87 = vmul.f32 %v23, %v23
    %v88 = vmul.f32 %v24, %v24
    %v89 = vmul.f32 %v25, %v25
    %v90 = vmul.f32 %v26, %v26
    %v91 = vmul.f32 %v27, %v27
    %v92 = vmul.f32 %v28, %v28
    %v93 = vmul.f32 %v29, %v29
    %v94 = vmul.f32 %v30, %v30
    %v95 = vmul.f32 %v31, %v31
    %v96 = vmul.f32 %v32, %v32
    %v97 = vmul.f32 %v33, %v33
    %v98 = vmul.f32 %v34, %v34
    %v99 = vmul.f32 %v35, %v35
    %v100 = vmul.f32 %v36, %v36
    %v101 = vmul.f32 %v37, %v37
    %v102 = vmul.f32 %v38, %v38
    %v103 = vmul.f32 %v39, %v39
    %v104 = vmul.f32 %v40, %v40
    %v105 = vmul.f32 %v41, %v41
    %v106 = vmul.f32 %v42, %v42
    %v107 = vmul.f32 %v43, %v43
    %v108 = vmul.f32 %v44, %v44
    %v109 = vmul.f32 %v45, %v45
    %vm110 = vcmask 523264
    %v111 = vsel %vm110, %v78, 0.0
    %112 = vadd.xlane.f32.xlu0 %v111
    %v113 = vpop.xlane.xlu0 %112
    %v114 = vsel %vm110, %v79, 0.0
    %115 = vadd.xlane.f32.xlu0 %v114
    %v116 = vpop.xlane.xlu0 %115
    %v117 = vsel %vm110, %v80, 0.0
    %118 = vadd.xlane.f32.xlu0 %v117
    %v119 = vpop.xlane.xlu0 %118
    %v120 = vsel %vm110, %v81, 0.0
    %121 = vadd.xlane.f32.xlu0 %v120
    %v122 = vpop.xlane.xlu0 %121
    %v123 = vsel %vm110, %v82, 0.0
    %124 = vadd.xlane.f32.xlu0 %v123
    %v125 = vpop.xlane.xlu0 %124
    %v126 = vsel %vm110, %v83, 0.0
    %127 = vadd.xlane.f32.xlu0 %v126
    %v128 = vpop.xlane.xlu0 %127
    %v129 = vsel %vm110, %v84, 0.0
    %130 = vadd.xlane.f32.xlu0 %v129
    %v131 = vpop.xlane.xlu0 %130
    %v132 = vsel %vm110, %v85, 0.0
    %133 = vadd.xlane.f32.xlu0 %v132
    %v134 = vpop.xlane.xlu0 %133
    %v135 = vsel %vm110, %v86, 0.0
    %136 = vadd.xlane.f32.xlu0 %v135
    %v137 = vpop.xlane.xlu0 %136
    %v138 = vsel %vm110, %v87, 0.0
    %139 = vadd.xlane.f32.xlu0 %v138
    %v140 = vpop.xlane.xlu0 %139
    %v141 = vsel %vm110, %v88, 0.0
    %142 = vadd.xlane.f32.xlu0 %v141
    %v143 = vpop.xlane.xlu0 %142
    %v144 = vsel %vm110, %v89, 0.0
    %145 = vadd.xlane.f32.xlu0 %v144
    %v146 = vpop.xlane.xlu0 %145
    %v147 = vsel %vm110, %v90, 0.0
    %148 = vadd.xlane.f32.xlu0 %v147
    %v149 = vpop.xlane.xlu0 %148
    %v150 = vsel %vm110, %v91, 0.0
    %151 = vadd.xlane.f32.xlu0 %v150
    %v152 = vpop.xlane.xlu0 %151
    %v153 = vsel %vm110, %v92, 0.0
    %154 = vadd.xlane.f32.xlu0 %v153
    %v155 = vpop.xlane.xlu0 %154
    %v156 = vsel %vm110, %v93, 0.0
    %157 = vadd.xlane.f32.xlu0 %v156
    %v158 = vpop.xlane.xlu0 %157
    %v159 = vsel %vm110, %v94, 0.0
    %160 = vadd.xlane.f32.xlu0 %v159
    %v161 = vpop.xlane.xlu0 %160
    %v162 = vsel %vm110, %v95, 0.0
    %163 = vadd.xlane.f32.xlu0 %v162
    %v164 = vpop.xlane.xlu0 %163
    %v165 = vsel %vm110, %v96, 0.0
    %166 = vadd.xlane.f32.xlu0 %v165
    %v167 = vpop.xlane.xlu0 %166
    %v168 = vsel %vm110, %v97, 0.0
    %169 = vadd.xlane.f32.xlu0 %v168
    %v170 = vpop.xlane.xlu0 %169
    %v171 = vsel %vm110, %v98, 0.0
    %172 = vadd.xlane.f32.xlu0 %v171
    %v173 = vpop.xlane.xlu0 %172
    %v174 = vsel %vm110, %v99, 0.0
    %175 = vadd.xlane.f32.xlu0 %v174
    %v176 = vpop.xlane.xlu0 %175
    %v177 = vsel %vm110, %v100, 0.0
    %178 = vadd.xlane.f32.xlu0 %v177
    %v179 = vpop.xlane.xlu0 %178
    %v180 = vsel %vm110, %v101, 0.0
    %181 = vadd.xlane.f32.xlu0 %v180
    %v182 = vpop.xlane.xlu0 %181
    %v183 = vsel %vm110, %v102, 0.0
    %184 = vadd.xlane.f32.xlu0 %v183
    %v185 = vpop.xlane.xlu0 %184
    %v186 = vsel %vm110, %v103, 0.0
    %187 = vadd.xlane.f32.xlu0 %v186
    %v188 = vpop.xlane.xlu0 %187
    %v189 = vsel %vm110, %v104, 0.0
    %190 = vadd.xlane.f32.xlu0 %v189
    %v191 = vpop.xlane.xlu0 %190
    %v192 = vsel %vm110, %v105, 0.0
    %193 = vadd.xlane.f32.xlu0 %v192
    %v194 = vpop.xlane.xlu0 %193
    %v195 = vsel %vm110, %v106, 0.0
    %196 = vadd.xlane.f32.xlu0 %v195
    %v197 = vpop.xlane.xlu0 %196
    %v198 = vsel %vm110, %v107, 0.0
    %199 = vadd.xlane.f32.xlu0 %v198
    %v200 = vpop.xlane.xlu0 %199
    %v201 = vsel %vm110, %v108, 0.0
    %202 = vadd.xlane.f32.xlu0 %v201
    %v203 = vpop.xlane.xlu0 %202
    %v204 = vsel %vm110, %v109, 0.0
    %205 = vadd.xlane.f32.xlu0 %v204
    %v206 = vpop.xlane.xlu0 %205
    %v207 = vrsqrt.pop %v113
    %v208 = vmul.f32 %v113, %v207
    %vm209 = vcmp.eq.f32.partialorder %v113, inf
    %v210 = vsel %vm209, %v113, %v208
    %vm211 = vcmp.eq.f32.partialorder %v113, 0.0
    %v212 = vand.u32 %v113, 2147483648
    %v213 = vsel %vm211, %v212, %v210
    %v214 = vrsqrt.pop %v116
    %v215 = vmul.f32 %v116, %v214
    %vm216 = vcmp.eq.f32.partialorder %v116, inf
    %v217 = vsel %vm216, %v116, %v215
    %vm218 = vcmp.eq.f32.partialorder %v116, 0.0
    %v219 = vand.u32 %v116, 2147483648
    %v220 = vsel %vm218, %v219, %v217
    %v221 = vrsqrt.pop %v119
    %v222 = vmul.f32 %v119, %v221
    %vm223 = vcmp.eq.f32.partialorder %v119, inf
    %v224 = vsel %vm223, %v119, %v222
    %vm225 = vcmp.eq.f32.partialorder %v119, 0.0
    %v226 = vand.u32 %v119, 2147483648
    %v227 = vsel %vm225, %v226, %v224
    %v228 = vrsqrt.pop %v122
    %v229 = vmul.f32 %v122, %v228
    %vm230 = vcmp.eq.f32.partialorder %v122, inf
    %v231 = vsel %vm230, %v122, %v229
    %vm232 = vcmp.eq.f32.partialorder %v122, 0.0
    %v233 = vand.u32 %v122, 2147483648
    %v234 = vsel %vm232, %v233, %v231
    %v235 = vrsqrt.pop %v125
    %v236 = vmul.f32 %v125, %v235
    %vm237 = vcmp.eq.f32.partialorder %v125, inf
    %v238 = vsel %vm237, %v125, %v236
    %vm239 = vcmp.eq.f32.partialorder %v125, 0.0
    %v240 = vand.u32 %v125, 2147483648
    %v241 = vsel %vm239, %v240, %v238
    %v242 = vrsqrt.pop %v128
    %v243 = vmul.f32 %v128, %v242
    %vm244 = vcmp.eq.f32.partialorder %v128, inf
    %v245 = vsel %vm244, %v128, %v243
    %vm246 = vcmp.eq.f32.partialorder %v128, 0.0
    %v247 = vand.u32 %v128, 2147483648
    %v248 = vsel %vm246, %v247, %v245
    %v249 = vrsqrt.pop %v131
    %v250 = vmul.f32 %v131, %v249
    %vm251 = vcmp.eq.f32.partialorder %v131, inf
    %v252 = vsel %vm251, %v131, %v250
    %vm253 = vcmp.eq.f32.partialorder %v131, 0.0
    %v254 = vand.u32 %v131, 2147483648
    %v255 = vsel %vm253, %v254, %v252
    %v256 = vrsqrt.pop %v134
    %v257 = vmul.f32 %v134, %v256
    %vm258 = vcmp.eq.f32.partialorder %v134, inf
    %v259 = vsel %vm258, %v134, %v257
    %vm260 = vcmp.eq.f32.partialorder %v134, 0.0
    %v261 = vand.u32 %v134, 2147483648
    %v262 = vsel %vm260, %v261, %v259
    %v263 = vrsqrt.pop %v137
    %v264 = vmul.f32 %v137, %v263
    %vm265 = vcmp.eq.f32.partialorder %v137, inf
    %v266 = vsel %vm265, %v137, %v264
    %vm267 = vcmp.eq.f32.partialorder %v137, 0.0
    %v268 = vand.u32 %v137, 2147483648
    %v269 = vsel %vm267, %v268, %v266
    %v270 = vrsqrt.pop %v140
    %v271 = vmul.f32 %v140, %v270
    %vm272 = vcmp.eq.f32.partialorder %v140, inf
    %v273 = vsel %vm272, %v140, %v271
    %vm274 = vcmp.eq.f32.partialorder %v140, 0.0
    %v275 = vand.u32 %v140, 2147483648
    %v276 = vsel %vm274, %v275, %v273
    %v277 = vrsqrt.pop %v143
    %v278 = vmul.f32 %v143, %v277
    %vm279 = vcmp.eq.f32.partialorder %v143, inf
    %v280 = vsel %vm279, %v143, %v278
    %vm281 = vcmp.eq.f32.partialorder %v143, 0.0
    %v282 = vand.u32 %v143, 2147483648
    %v283 = vsel %vm281, %v282, %v280
    %v284 = vrsqrt.pop %v146
    %v285 = vmul.f32 %v146, %v284
    %vm286 = vcmp.eq.f32.partialorder %v146, inf
    %v287 = vsel %vm286, %v146, %v285
    %vm288 = vcmp.eq.f32.partialorder %v146, 0.0
    %v289 = vand.u32 %v146, 2147483648
    %v290 = vsel %vm288, %v289, %v287
    %v291 = vrsqrt.pop %v149
    %v292 = vmul.f32 %v149, %v291
    %vm293 = vcmp.eq.f32.partialorder %v149, inf
    %v294 = vsel %vm293, %v149, %v292
    %vm295 = vcmp.eq.f32.partialorder %v149, 0.0
    %v296 = vand.u32 %v149, 2147483648
    %v297 = vsel %vm295, %v296, %v294
    %v298 = vrsqrt.pop %v152
    %v299 = vmul.f32 %v152, %v298
    %vm300 = vcmp.eq.f32.partialorder %v152, inf
    %v301 = vsel %vm300, %v152, %v299
    %vm302 = vcmp.eq.f32.partialorder %v152, 0.0
    %v303 = vand.u32 %v152, 2147483648
    %v304 = vsel %vm302, %v303, %v301
    %v305 = vrsqrt.pop %v155
    %v306 = vmul.f32 %v155, %v305
    %vm307 = vcmp.eq.f32.partialorder %v155, inf
    %v308 = vsel %vm307, %v155, %v306
    %vm309 = vcmp.eq.f32.partialorder %v155, 0.0
    %v310 = vand.u32 %v155, 2147483648
    %v311 = vsel %vm309, %v310, %v308
    %v312 = vrsqrt.pop %v158
    %v313 = vmul.f32 %v158, %v312
    %vm314 = vcmp.eq.f32.partialorder %v158, inf
    %v315 = vsel %vm314, %v158, %v313
    %vm316 = vcmp.eq.f32.partialorder %v158, 0.0
    %v317 = vand.u32 %v158, 2147483648
    %v318 = vsel %vm316, %v317, %v315
    %v319 = vrsqrt.pop %v161
    %v320 = vmul.f32 %v161, %v319
    %vm321 = vcmp.eq.f32.partialorder %v161, inf
    %v322 = vsel %vm321, %v161, %v320
    %vm323 = vcmp.eq.f32.partialorder %v161, 0.0
    %v324 = vand.u32 %v161, 2147483648
    %v325 = vsel %vm323, %v324, %v322
    %v326 = vrsqrt.pop %v164
    %v327 = vmul.f32 %v164, %v326
    %vm328 = vcmp.eq.f32.partialorder %v164, inf
    %v329 = vsel %vm328, %v164, %v327
    %vm330 = vcmp.eq.f32.partialorder %v164, 0.0
    %v331 = vand.u32 %v164, 2147483648
    %v332 = vsel %vm330, %v331, %v329
    %v333 = vrsqrt.pop %v167
    %v334 = vmul.f32 %v167, %v333
    %vm335 = vcmp.eq.f32.partialorder %v167, inf
    %v336 = vsel %vm335, %v167, %v334
    %vm337 = vcmp.eq.f32.partialorder %v167, 0.0
    %v338 = vand.u32 %v167, 2147483648
    %v339 = vsel %vm337, %v338, %v336
    %v340 = vrsqrt.pop %v170
    %v341 = vmul.f32 %v170, %v340
    %vm342 = vcmp.eq.f32.partialorder %v170, inf
    %v343 = vsel %vm342, %v170, %v341
    %vm344 = vcmp.eq.f32.partialorder %v170, 0.0
    %v345 = vand.u32 %v170, 2147483648
    %v346 = vsel %vm344, %v345, %v343
    %v347 = vrsqrt.pop %v173
    %v348 = vmul.f32 %v173, %v347
    %vm349 = vcmp.eq.f32.partialorder %v173, inf
    %v350 = vsel %vm349, %v173, %v348
    %vm351 = vcmp.eq.f32.partialorder %v173, 0.0
    %v352 = vand.u32 %v173, 2147483648
    %v353 = vsel %vm351, %v352, %v350
    %v354 = vrsqrt.pop %v176
    %v355 = vmul.f32 %v176, %v354
    %vm356 = vcmp.eq.f32.partialorder %v176, inf
    %v357 = vsel %vm356, %v176, %v355
    %vm358 = vcmp.eq.f32.partialorder %v176, 0.0
    %v359 = vand.u32 %v176, 2147483648
    %v360 = vsel %vm358, %v359, %v357
    %v361 = vrsqrt.pop %v179
    %v362 = vmul.f32 %v179, %v361
    %vm363 = vcmp.eq.f32.partialorder %v179, inf
    %v364 = vsel %vm363, %v179, %v362
    %vm365 = vcmp.eq.f32.partialorder %v179, 0.0
    %v366 = vand.u32 %v179, 2147483648
    %v367 = vsel %vm365, %v366, %v364
    %v368 = vrsqrt.pop %v182
    %v369 = vmul.f32 %v182, %v368
    %vm370 = vcmp.eq.f32.partialorder %v182, inf
    %v371 = vsel %vm370, %v182, %v369
    %vm372 = vcmp.eq.f32.partialorder %v182, 0.0
    %v373 = vand.u32 %v182, 2147483648
    %v374 = vsel %vm372, %v373, %v371
    %v375 = vrsqrt.pop %v185
    %v376 = vmul.f32 %v185, %v375
    %vm377 = vcmp.eq.f32.partialorder %v185, inf
    %v378 = vsel %vm377, %v185, %v376
    %vm379 = vcmp.eq.f32.partialorder %v185, 0.0
    %v380 = vand.u32 %v185, 2147483648
    %v381 = vsel %vm379, %v380, %v378
    %v382 = vrsqrt.pop %v188
    %v383 = vmul.f32 %v188, %v382
    %vm384 = vcmp.eq.f32.partialorder %v188, inf
    %v385 = vsel %vm384, %v188, %v383
    %vm386 = vcmp.eq.f32.partialorder %v188, 0.0
    %v387 = vand.u32 %v188, 2147483648
    %v388 = vsel %vm386, %v387, %v385
    %v389 = vrsqrt.pop %v191
    %v390 = vmul.f32 %v191, %v389
    %vm391 = vcmp.eq.f32.partialorder %v191, inf
    %v392 = vsel %vm391, %v191, %v390
    %vm393 = vcmp.eq.f32.partialorder %v191, 0.0
    %v394 = vand.u32 %v191, 2147483648
    %v395 = vsel %vm393, %v394, %v392
    %v396 = vrsqrt.pop %v194
    %v397 = vmul.f32 %v194, %v396
    %vm398 = vcmp.eq.f32.partialorder %v194, inf
    %v399 = vsel %vm398, %v194, %v397
    %vm400 = vcmp.eq.f32.partialorder %v194, 0.0
    %v401 = vand.u32 %v194, 2147483648
    %v402 = vsel %vm400, %v401, %v399
    %v403 = vrsqrt.pop %v197
    %v404 = vmul.f32 %v197, %v403
    %vm405 = vcmp.eq.f32.partialorder %v197, inf
    %v406 = vsel %vm405, %v197, %v404
    %vm407 = vcmp.eq.f32.partialorder %v197, 0.0
    %v408 = vand.u32 %v197, 2147483648
    %v409 = vsel %vm407, %v408, %v406
    %v410 = vrsqrt.pop %v200
    %v411 = vmul.f32 %v200, %v410
    %vm412 = vcmp.eq.f32.partialorder %v200, inf
    %v413 = vsel %vm412, %v200, %v411
    %vm414 = vcmp.eq.f32.partialorder %v200, 0.0
    %v415 = vand.u32 %v200, 2147483648
    %v416 = vsel %vm414, %v415, %v413
    %v417 = vrsqrt.pop %v203
    %v418 = vmul.f32 %v203, %v417
    %vm419 = vcmp.eq.f32.partialorder %v203, inf
    %v420 = vsel %vm419, %v203, %v418
    %vm421 = vcmp.eq.f32.partialorder %v203, 0.0
    %v422 = vand.u32 %v203, 2147483648
    %v423 = vsel %vm421, %v422, %v420
    %v424 = vrsqrt.pop %v206
    %v425 = vmul.f32 %v206, %v424
    %vm426 = vcmp.eq.f32.partialorder %v206, inf
    %v427 = vsel %vm426, %v206, %v425
    %vm428 = vcmp.eq.f32.partialorder %v206, 0.0
    %v429 = vand.u32 %v206, 2147483648
    %v430 = vsel %vm428, %v429, %v427
    %v431 = vmax.f32 %v213, 1e-12
    %v432 = vmax.f32 %v220, 1e-12
    %v433 = vmax.f32 %v227, 1e-12
    %v434 = vmax.f32 %v234, 1e-12
    %v435 = vmax.f32 %v241, 1e-12
    %v436 = vmax.f32 %v248, 1e-12
    %v437 = vmax.f32 %v255, 1e-12
    %v438 = vmax.f32 %v262, 1e-12
    %v439 = vmax.f32 %v269, 1e-12
    %v440 = vmax.f32 %v276, 1e-12
    %v441 = vmax.f32 %v283, 1e-12
    %v442 = vmax.f32 %v290, 1e-12
    %v443 = vmax.f32 %v297, 1e-12
    %v444 = vmax.f32 %v304, 1e-12
    %v445 = vmax.f32 %v311, 1e-12
    %v446 = vmax.f32 %v318, 1e-12
    %v447 = vmax.f32 %v325, 1e-12
    %v448 = vmax.f32 %v332, 1e-12
    %v449 = vmax.f32 %v339, 1e-12
    %v450 = vmax.f32 %v346, 1e-12
    %v451 = vmax.f32 %v353, 1e-12
    %v452 = vmax.f32 %v360, 1e-12
    %v453 = vmax.f32 %v367, 1e-12
    %v454 = vmax.f32 %v374, 1e-12
    %v455 = vmax.f32 %v381, 1e-12
    %v456 = vmax.f32 %v388, 1e-12
    %v457 = vmax.f32 %v395, 1e-12
    %v458 = vmax.f32 %v402, 1e-12
    %v459 = vmax.f32 %v409, 1e-12
    %v460 = vmax.f32 %v416, 1e-12
    %v461 = vmax.f32 %v423, 1e-12
    %v462 = vmax.f32 %v430, 1e-12
    %v463 = vrcp.pop %v431
    %v464 = vmul.f32 %v14, %v463
    %v465 = vrcp.pop %v432
    %v466 = vmul.f32 %v15, %v465
    %v467 = vrcp.pop %v433
    %v468 = vmul.f32 %v16, %v467
    %v469 = vrcp.pop %v434
    %v470 = vmul.f32 %v17, %v469
    %v471 = vrcp.pop %v435
    %v472 = vmul.f32 %v18, %v471
    %v473 = vrcp.pop %v436
    %v474 = vmul.f32 %v19, %v473
    %v475 = vrcp.pop %v437
    %v476 = vmul.f32 %v20, %v475
    %v477 = vrcp.pop %v438
    %v478 = vmul.f32 %v21, %v477
    %v479 = vrcp.pop %v439
    %v480 = vmul.f32 %v22, %v479
    %v481 = vrcp.pop %v440
    %v482 = vmul.f32 %v23, %v481
    %v483 = vrcp.pop %v441
    %v484 = vmul.f32 %v24, %v483
    %v485 = vrcp.pop %v442
    %v486 = vmul.f32 %v25, %v485
    %v487 = vrcp.pop %v443
    %v488 = vmul.f32 %v26, %v487
    %v489 = vrcp.pop %v444
    %v490 = vmul.f32 %v27, %v489
    %v491 = vrcp.pop %v445
    %v492 = vmul.f32 %v28, %v491
    %v493 = vrcp.pop %v446
    %v494 = vmul.f32 %v29, %v493
    %v495 = vrcp.pop %v447
    %v496 = vmul.f32 %v30, %v495
    %v497 = vrcp.pop %v448
    %v498 = vmul.f32 %v31, %v497
    %v499 = vrcp.pop %v449
    %v500 = vmul.f32 %v32, %v499
    %v501 = vrcp.pop %v450
    %v502 = vmul.f32 %v33, %v501
    %v503 = vrcp.pop %v451
    %v504 = vmul.f32 %v34, %v503
    %v505 = vrcp.pop %v452
    %v506 = vmul.f32 %v35, %v505
    %v507 = vrcp.pop %v453
    %v508 = vmul.f32 %v36, %v507
    %v509 = vrcp.pop %v454
    %v510 = vmul.f32 %v37, %v509
    %v511 = vrcp.pop %v455
    %v512 = vmul.f32 %v38, %v511
    %v513 = vrcp.pop %v456
    %v514 = vmul.f32 %v39, %v513
    %v515 = vrcp.pop %v457
    %v516 = vmul.f32 %v40, %v515
    %v517 = vrcp.pop %v458
    %v518 = vmul.f32 %v41, %v517
    %v519 = vrcp.pop %v459
    %v520 = vmul.f32 %v42, %v519
    %v521 = vrcp.pop %v460
    %v522 = vmul.f32 %v43, %v521
    %v523 = vrcp.pop %v461
    %v524 = vmul.f32 %v44, %v523
    %v525 = vrcp.pop %v462
    %v526 = vmul.f32 %v45, %v525
    %v527 = vmul.f32 %v46, %v46
    %v528 = vmul.f32 %v47, %v47
    %v529 = vmul.f32 %v48, %v48
    %v530 = vmul.f32 %v49, %v49
    %v531 = vmul.f32 %v50, %v50
    %v532 = vmul.f32 %v51, %v51
    %v533 = vmul.f32 %v52, %v52
    %v534 = vmul.f32 %v53, %v53
    %v535 = vmul.f32 %v54, %v54
    %v536 = vmul.f32 %v55, %v55
    %v537 = vmul.f32 %v56, %v56
    %v538 = vmul.f32 %v57, %v57
    %v539 = vmul.f32 %v58, %v58
    %v540 = vmul.f32 %v59, %v59
    %v541 = vmul.f32 %v60, %v60
    %v542 = vmul.f32 %v61, %v61
    %v543 = vmul.f32 %v62, %v62
    %v544 = vmul.f32 %v63, %v63
    %v545 = vmul.f32 %v64, %v64
    %v546 = vmul.f32 %v65, %v65
    %v547 = vmul.f32 %v66, %v66
    %v548 = vmul.f32 %v67, %v67
    %v549 = vmul.f32 %v68, %v68
    %v550 = vmul.f32 %v69, %v69
    %v551 = vmul.f32 %v70, %v70
    %v552 = vmul.f32 %v71, %v71
    %v553 = vmul.f32 %v72, %v72
    %v554 = vmul.f32 %v73, %v73
    %v555 = vmul.f32 %v74, %v74
    %v556 = vmul.f32 %v75, %v75
    %v557 = vmul.f32 %v76, %v76
    %v558 = vmul.f32 %v77, %v77
    %v559 = vsel %vm110, %v527, 0.0
    %560 = vadd.xlane.f32.xlu0 %v559
    %v561 = vpop.xlane.xlu0 %560
    %v562 = vsel %vm110, %v528, 0.0
    %563 = vadd.xlane.f32.xlu0 %v562
    %v564 = vpop.xlane.xlu0 %563
    %v565 = vsel %vm110, %v529, 0.0
    %566 = vadd.xlane.f32.xlu0 %v565
    %v567 = vpop.xlane.xlu0 %566
    %v568 = vsel %vm110, %v530, 0.0
    %569 = vadd.xlane.f32.xlu0 %v568
    %v570 = vpop.xlane.xlu0 %569
    %v571 = vsel %vm110, %v531, 0.0
    %572 = vadd.xlane.f32.xlu0 %v571
    %v573 = vpop.xlane.xlu0 %572
    %v574 = vsel %vm110, %v532, 0.0
    %575 = vadd.xlane.f32.xlu0 %v574
    %v576 = vpop.xlane.xlu0 %575
    %v577 = vsel %vm110, %v533, 0.0
    %578 = vadd.xlane.f32.xlu0 %v577
    %v579 = vpop.xlane.xlu0 %578
    %v580 = vsel %vm110, %v534, 0.0
    %581 = vadd.xlane.f32.xlu0 %v580
    %v582 = vpop.xlane.xlu0 %581
    %v583 = vsel %vm110, %v535, 0.0
    %584 = vadd.xlane.f32.xlu0 %v583
    %v585 = vpop.xlane.xlu0 %584
    %v586 = vsel %vm110, %v536, 0.0
    %587 = vadd.xlane.f32.xlu0 %v586
    %v588 = vpop.xlane.xlu0 %587
    %v589 = vsel %vm110, %v537, 0.0
    %590 = vadd.xlane.f32.xlu0 %v589
    %v591 = vpop.xlane.xlu0 %590
    %v592 = vsel %vm110, %v538, 0.0
    %593 = vadd.xlane.f32.xlu0 %v592
    %v594 = vpop.xlane.xlu0 %593
    %v595 = vsel %vm110, %v539, 0.0
    %596 = vadd.xlane.f32.xlu0 %v595
    %v597 = vpop.xlane.xlu0 %596
    %v598 = vsel %vm110, %v540, 0.0
    %599 = vadd.xlane.f32.xlu0 %v598
    %v600 = vpop.xlane.xlu0 %599
    %v601 = vsel %vm110, %v541, 0.0
    %602 = vadd.xlane.f32.xlu0 %v601
    %v603 = vpop.xlane.xlu0 %602
    %v604 = vsel %vm110, %v542, 0.0
    %605 = vadd.xlane.f32.xlu0 %v604
    %v606 = vpop.xlane.xlu0 %605
    %v607 = vsel %vm110, %v543, 0.0
    %608 = vadd.xlane.f32.xlu0 %v607
    %v609 = vpop.xlane.xlu0 %608
    %v610 = vsel %vm110, %v544, 0.0
    %611 = vadd.xlane.f32.xlu0 %v610
    %v612 = vpop.xlane.xlu0 %611
    %v613 = vsel %vm110, %v545, 0.0
    %614 = vadd.xlane.f32.xlu0 %v613
    %v615 = vpop.xlane.xlu0 %614
    %v616 = vsel %vm110, %v546, 0.0
    %617 = vadd.xlane.f32.xlu0 %v616
    %v618 = vpop.xlane.xlu0 %617
    %v619 = vsel %vm110, %v547, 0.0
    %620 = vadd.xlane.f32.xlu0 %v619
    %v621 = vpop.xlane.xlu0 %620
    %v622 = vsel %vm110, %v548, 0.0
    %623 = vadd.xlane.f32.xlu0 %v622
    %v624 = vpop.xlane.xlu0 %623
    %v625 = vsel %vm110, %v549, 0.0
    %626 = vadd.xlane.f32.xlu0 %v625
    %v627 = vpop.xlane.xlu0 %626
    %v628 = vsel %vm110, %v550, 0.0
    %629 = vadd.xlane.f32.xlu0 %v628
    %v630 = vpop.xlane.xlu0 %629
    %v631 = vsel %vm110, %v551, 0.0
    %632 = vadd.xlane.f32.xlu0 %v631
    %v633 = vpop.xlane.xlu0 %632
    %v634 = vsel %vm110, %v552, 0.0
    %635 = vadd.xlane.f32.xlu0 %v634
    %v636 = vpop.xlane.xlu0 %635
    %v637 = vsel %vm110, %v553, 0.0
    %638 = vadd.xlane.f32.xlu0 %v637
    %v639 = vpop.xlane.xlu0 %638
    %v640 = vsel %vm110, %v554, 0.0
    %641 = vadd.xlane.f32.xlu0 %v640
    %v642 = vpop.xlane.xlu0 %641
    %v643 = vsel %vm110, %v555, 0.0
    %644 = vadd.xlane.f32.xlu0 %v643
    %v645 = vpop.xlane.xlu0 %644
    %v646 = vsel %vm110, %v556, 0.0
    %647 = vadd.xlane.f32.xlu0 %v646
    %v648 = vpop.xlane.xlu0 %647
    %v649 = vsel %vm110, %v557, 0.0
    %650 = vadd.xlane.f32.xlu0 %v649
    %v651 = vpop.xlane.xlu0 %650
    %v652 = vsel %vm110, %v558, 0.0
    %653 = vadd.xlane.f32.xlu0 %v652
    %v654 = vpop.xlane.xlu0 %653
    %v655 = vrsqrt.pop %v561
    %v656 = vmul.f32 %v561, %v655
    %vm657 = vcmp.eq.f32.partialorder %v561, inf
    %v658 = vsel %vm657, %v561, %v656
    %vm659 = vcmp.eq.f32.partialorder %v561, 0.0
    %v660 = vand.u32 %v561, 2147483648
    %v661 = vsel %vm659, %v660, %v658
    %v662 = vrsqrt.pop %v564
    %v663 = vmul.f32 %v564, %v662
    %vm664 = vcmp.eq.f32.partialorder %v564, inf
    %v665 = vsel %vm664, %v564, %v663
    %vm666 = vcmp.eq.f32.partialorder %v564, 0.0
    %v667 = vand.u32 %v564, 2147483648
    %v668 = vsel %vm666, %v667, %v665
    %v669 = vrsqrt.pop %v567
    %v670 = vmul.f32 %v567, %v669
    %vm671 = vcmp.eq.f32.partialorder %v567, inf
    %v672 = vsel %vm671, %v567, %v670
    %vm673 = vcmp.eq.f32.partialorder %v567, 0.0
    %v674 = vand.u32 %v567, 2147483648
    %v675 = vsel %vm673, %v674, %v672
    %v676 = vrsqrt.pop %v570
    %v677 = vmul.f32 %v570, %v676
    %vm678 = vcmp.eq.f32.partialorder %v570, inf
    %v679 = vsel %vm678, %v570, %v677
    %vm680 = vcmp.eq.f32.partialorder %v570, 0.0
    %v681 = vand.u32 %v570, 2147483648
    %v682 = vsel %vm680, %v681, %v679
    %v683 = vrsqrt.pop %v573
    %v684 = vmul.f32 %v573, %v683
    %vm685 = vcmp.eq.f32.partialorder %v573, inf
    %v686 = vsel %vm685, %v573, %v684
    %vm687 = vcmp.eq.f32.partialorder %v573, 0.0
    %v688 = vand.u32 %v573, 2147483648
    %v689 = vsel %vm687, %v688, %v686
    %v690 = vrsqrt.pop %v576
    %v691 = vmul.f32 %v576, %v690
    %vm692 = vcmp.eq.f32.partialorder %v576, inf
    %v693 = vsel %vm692, %v576, %v691
    %vm694 = vcmp.eq.f32.partialorder %v576, 0.0
    %v695 = vand.u32 %v576, 2147483648
    %v696 = vsel %vm694, %v695, %v693
    %v697 = vrsqrt.pop %v579
    %v698 = vmul.f32 %v579, %v697
    %vm699 = vcmp.eq.f32.partialorder %v579, inf
    %v700 = vsel %vm699, %v579, %v698
    %vm701 = vcmp.eq.f32.partialorder %v579, 0.0
    %v702 = vand.u32 %v579, 2147483648
    %v703 = vsel %vm701, %v702, %v700
    %v704 = vrsqrt.pop %v582
    %v705 = vmul.f32 %v582, %v704
    %vm706 = vcmp.eq.f32.partialorder %v582, inf
    %v707 = vsel %vm706, %v582, %v705
    %vm708 = vcmp.eq.f32.partialorder %v582, 0.0
    %v709 = vand.u32 %v582, 2147483648
    %v710 = vsel %vm708, %v709, %v707
    %v711 = vrsqrt.pop %v585
    %v712 = vmul.f32 %v585, %v711
    %vm713 = vcmp.eq.f32.partialorder %v585, inf
    %v714 = vsel %vm713, %v585, %v712
    %vm715 = vcmp.eq.f32.partialorder %v585, 0.0
    %v716 = vand.u32 %v585, 2147483648
    %v717 = vsel %vm715, %v716, %v714
    %v718 = vrsqrt.pop %v588
    %v719 = vmul.f32 %v588, %v718
    %vm720 = vcmp.eq.f32.partialorder %v588, inf
    %v721 = vsel %vm720, %v588, %v719
    %vm722 = vcmp.eq.f32.partialorder %v588, 0.0
    %v723 = vand.u32 %v588, 2147483648
    %v724 = vsel %vm722, %v723, %v721
    %v725 = vrsqrt.pop %v591
    %v726 = vmul.f32 %v591, %v725
    %vm727 = vcmp.eq.f32.partialorder %v591, inf
    %v728 = vsel %vm727, %v591, %v726
    %vm729 = vcmp.eq.f32.partialorder %v591, 0.0
    %v730 = vand.u32 %v591, 2147483648
    %v731 = vsel %vm729, %v730, %v728
    %v732 = vrsqrt.pop %v594
    %v733 = vmul.f32 %v594, %v732
    %vm734 = vcmp.eq.f32.partialorder %v594, inf
    %v735 = vsel %vm734, %v594, %v733
    %vm736 = vcmp.eq.f32.partialorder %v594, 0.0
    %v737 = vand.u32 %v594, 2147483648
    %v738 = vsel %vm736, %v737, %v735
    %v739 = vrsqrt.pop %v597
    %v740 = vmul.f32 %v597, %v739
    %vm741 = vcmp.eq.f32.partialorder %v597, inf
    %v742 = vsel %vm741, %v597, %v740
    %vm743 = vcmp.eq.f32.partialorder %v597, 0.0
    %v744 = vand.u32 %v597, 2147483648
    %v745 = vsel %vm743, %v744, %v742
    %v746 = vrsqrt.pop %v600
    %v747 = vmul.f32 %v600, %v746
    %vm748 = vcmp.eq.f32.partialorder %v600, inf
    %v749 = vsel %vm748, %v600, %v747
    %vm750 = vcmp.eq.f32.partialorder %v600, 0.0
    %v751 = vand.u32 %v600, 2147483648
    %v752 = vsel %vm750, %v751, %v749
    %v753 = vrsqrt.pop %v603
    %v754 = vmul.f32 %v603, %v753
    %vm755 = vcmp.eq.f32.partialorder %v603, inf
    %v756 = vsel %vm755, %v603, %v754
    %vm757 = vcmp.eq.f32.partialorder %v603, 0.0
    %v758 = vand.u32 %v603, 2147483648
    %v759 = vsel %vm757, %v758, %v756
    %v760 = vrsqrt.pop %v606
    %v761 = vmul.f32 %v606, %v760
    %vm762 = vcmp.eq.f32.partialorder %v606, inf
    %v763 = vsel %vm762, %v606, %v761
    %vm764 = vcmp.eq.f32.partialorder %v606, 0.0
    %v765 = vand.u32 %v606, 2147483648
    %v766 = vsel %vm764, %v765, %v763
    %v767 = vrsqrt.pop %v609
    %v768 = vmul.f32 %v609, %v767
    %vm769 = vcmp.eq.f32.partialorder %v609, inf
    %v770 = vsel %vm769, %v609, %v768
    %vm771 = vcmp.eq.f32.partialorder %v609, 0.0
    %v772 = vand.u32 %v609, 2147483648
    %v773 = vsel %vm771, %v772, %v770
    %v774 = vrsqrt.pop %v612
    %v775 = vmul.f32 %v612, %v774
    %vm776 = vcmp.eq.f32.partialorder %v612, inf
    %v777 = vsel %vm776, %v612, %v775
    %vm778 = vcmp.eq.f32.partialorder %v612, 0.0
    %v779 = vand.u32 %v612, 2147483648
    %v780 = vsel %vm778, %v779, %v777
    %v781 = vrsqrt.pop %v615
    %v782 = vmul.f32 %v615, %v781
    %vm783 = vcmp.eq.f32.partialorder %v615, inf
    %v784 = vsel %vm783, %v615, %v782
    %vm785 = vcmp.eq.f32.partialorder %v615, 0.0
    %v786 = vand.u32 %v615, 2147483648
    %v787 = vsel %vm785, %v786, %v784
    %v788 = vrsqrt.pop %v618
    %v789 = vmul.f32 %v618, %v788
    %vm790 = vcmp.eq.f32.partialorder %v618, inf
    %v791 = vsel %vm790, %v618, %v789
    %vm792 = vcmp.eq.f32.partialorder %v618, 0.0
    %v793 = vand.u32 %v618, 2147483648
    %v794 = vsel %vm792, %v793, %v791
    %v795 = vrsqrt.pop %v621
    %v796 = vmul.f32 %v621, %v795
    %vm797 = vcmp.eq.f32.partialorder %v621, inf
    %v798 = vsel %vm797, %v621, %v796
    %vm799 = vcmp.eq.f32.partialorder %v621, 0.0
    %v800 = vand.u32 %v621, 2147483648
    %v801 = vsel %vm799, %v800, %v798
    %v802 = vrsqrt.pop %v624
    %v803 = vmul.f32 %v624, %v802
    %vm804 = vcmp.eq.f32.partialorder %v624, inf
    %v805 = vsel %vm804, %v624, %v803
    %vm806 = vcmp.eq.f32.partialorder %v624, 0.0
    %v807 = vand.u32 %v624, 2147483648
    %v808 = vsel %vm806, %v807, %v805
    %v809 = vrsqrt.pop %v627
    %v810 = vmul.f32 %v627, %v809
    %vm811 = vcmp.eq.f32.partialorder %v627, inf
    %v812 = vsel %vm811, %v627, %v810
    %vm813 = vcmp.eq.f32.partialorder %v627, 0.0
    %v814 = vand.u32 %v627, 2147483648
    %v815 = vsel %vm813, %v814, %v812
    %v816 = vrsqrt.pop %v630
    %v817 = vmul.f32 %v630, %v816
    %vm818 = vcmp.eq.f32.partialorder %v630, inf
    %v819 = vsel %vm818, %v630, %v817
    %vm820 = vcmp.eq.f32.partialorder %v630, 0.0
    %v821 = vand.u32 %v630, 2147483648
    %v822 = vsel %vm820, %v821, %v819
    %v823 = vrsqrt.pop %v633
    %v824 = vmul.f32 %v633, %v823
    %vm825 = vcmp.eq.f32.partialorder %v633, inf
    %v826 = vsel %vm825, %v633, %v824
    %vm827 = vcmp.eq.f32.partialorder %v633, 0.0
    %v828 = vand.u32 %v633, 2147483648
    %v829 = vsel %vm827, %v828, %v826
    %v830 = vrsqrt.pop %v636
    %v831 = vmul.f32 %v636, %v830
    %vm832 = vcmp.eq.f32.partialorder %v636, inf
    %v833 = vsel %vm832, %v636, %v831
    %vm834 = vcmp.eq.f32.partialorder %v636, 0.0
    %v835 = vand.u32 %v636, 2147483648
    %v836 = vsel %vm834, %v835, %v833
    %v837 = vrsqrt.pop %v639
    %v838 = vmul.f32 %v639, %v837
    %vm839 = vcmp.eq.f32.partialorder %v639, inf
    %v840 = vsel %vm839, %v639, %v838
    %vm841 = vcmp.eq.f32.partialorder %v639, 0.0
    %v842 = vand.u32 %v639, 2147483648
    %v843 = vsel %vm841, %v842, %v840
    %v844 = vrsqrt.pop %v642
    %v845 = vmul.f32 %v642, %v844
    %vm846 = vcmp.eq.f32.partialorder %v642, inf
    %v847 = vsel %vm846, %v642, %v845
    %vm848 = vcmp.eq.f32.partialorder %v642, 0.0
    %v849 = vand.u32 %v642, 2147483648
    %v850 = vsel %vm848, %v849, %v847
    %v851 = vrsqrt.pop %v645
    %v852 = vmul.f32 %v645, %v851
    %vm853 = vcmp.eq.f32.partialorder %v645, inf
    %v854 = vsel %vm853, %v645, %v852
    %vm855 = vcmp.eq.f32.partialorder %v645, 0.0
    %v856 = vand.u32 %v645, 2147483648
    %v857 = vsel %vm855, %v856, %v854
    %v858 = vrsqrt.pop %v648
    %v859 = vmul.f32 %v648, %v858
    %vm860 = vcmp.eq.f32.partialorder %v648, inf
    %v861 = vsel %vm860, %v648, %v859
    %vm862 = vcmp.eq.f32.partialorder %v648, 0.0
    %v863 = vand.u32 %v648, 2147483648
    %v864 = vsel %vm862, %v863, %v861
    %v865 = vrsqrt.pop %v651
    %v866 = vmul.f32 %v651, %v865
    %vm867 = vcmp.eq.f32.partialorder %v651, inf
    %v868 = vsel %vm867, %v651, %v866
    %vm869 = vcmp.eq.f32.partialorder %v651, 0.0
    %v870 = vand.u32 %v651, 2147483648
    %v871 = vsel %vm869, %v870, %v868
    %v872 = vrsqrt.pop %v654
    %v873 = vmul.f32 %v654, %v872
    %vm874 = vcmp.eq.f32.partialorder %v654, inf
    %v875 = vsel %vm874, %v654, %v873
    %vm876 = vcmp.eq.f32.partialorder %v654, 0.0
    %v877 = vand.u32 %v654, 2147483648
    %v878 = vsel %vm876, %v877, %v875
    %v879 = vmax.f32 %v661, 1e-12
    %v880 = vmax.f32 %v668, 1e-12
    %v881 = vmax.f32 %v675, 1e-12
    %v882 = vmax.f32 %v682, 1e-12
    %v883 = vmax.f32 %v689, 1e-12
    %v884 = vmax.f32 %v696, 1e-12
    %v885 = vmax.f32 %v703, 1e-12
    %v886 = vmax.f32 %v710, 1e-12
    %v887 = vmax.f32 %v717, 1e-12
    %v888 = vmax.f32 %v724, 1e-12
    %v889 = vmax.f32 %v731, 1e-12
    %v890 = vmax.f32 %v738, 1e-12
    %v891 = vmax.f32 %v745, 1e-12
    %v892 = vmax.f32 %v752, 1e-12
    %v893 = vmax.f32 %v759, 1e-12
    %v894 = vmax.f32 %v766, 1e-12
    %v895 = vmax.f32 %v773, 1e-12
    %v896 = vmax.f32 %v780, 1e-12
    %v897 = vmax.f32 %v787, 1e-12
    %v898 = vmax.f32 %v794, 1e-12
    %v899 = vmax.f32 %v801, 1e-12
    %v900 = vmax.f32 %v808, 1e-12
    %v901 = vmax.f32 %v815, 1e-12
    %v902 = vmax.f32 %v822, 1e-12
    %v903 = vmax.f32 %v829, 1e-12
    %v904 = vmax.f32 %v836, 1e-12
    %v905 = vmax.f32 %v843, 1e-12
    %v906 = vmax.f32 %v850, 1e-12
    %v907 = vmax.f32 %v857, 1e-12
    %v908 = vmax.f32 %v864, 1e-12
    %v909 = vmax.f32 %v871, 1e-12
    %v910 = vmax.f32 %v878, 1e-12
    %v911 = vrcp.pop %v879
    %v912 = vmul.f32 %v46, %v911
    %v913 = vrcp.pop %v880
    %v914 = vmul.f32 %v47, %v913
    %v915 = vrcp.pop %v881
    %v916 = vmul.f32 %v48, %v915
    %v917 = vrcp.pop %v882
    %v918 = vmul.f32 %v49, %v917
    %v919 = vrcp.pop %v883
    %v920 = vmul.f32 %v50, %v919
    %v921 = vrcp.pop %v884
    %v922 = vmul.f32 %v51, %v921
    %v923 = vrcp.pop %v885
    %v924 = vmul.f32 %v52, %v923
    %v925 = vrcp.pop %v886
    %v926 = vmul.f32 %v53, %v925
    %v927 = vrcp.pop %v887
    %v928 = vmul.f32 %v54, %v927
    %v929 = vrcp.pop %v888
    %v930 = vmul.f32 %v55, %v929
    %v931 = vrcp.pop %v889
    %v932 = vmul.f32 %v56, %v931
    %v933 = vrcp.pop %v890
    %v934 = vmul.f32 %v57, %v933
    %v935 = vrcp.pop %v891
    %v936 = vmul.f32 %v58, %v935
    %v937 = vrcp.pop %v892
    %v938 = vmul.f32 %v59, %v937
    %v939 = vrcp.pop %v893
    %v940 = vmul.f32 %v60, %v939
    %v941 = vrcp.pop %v894
    %v942 = vmul.f32 %v61, %v941
    %v943 = vrcp.pop %v895
    %v944 = vmul.f32 %v62, %v943
    %v945 = vrcp.pop %v896
    %v946 = vmul.f32 %v63, %v945
    %v947 = vrcp.pop %v897
    %v948 = vmul.f32 %v64, %v947
    %v949 = vrcp.pop %v898
    %v950 = vmul.f32 %v65, %v949
    %v951 = vrcp.pop %v899
    %v952 = vmul.f32 %v66, %v951
    %v953 = vrcp.pop %v900
    %v954 = vmul.f32 %v67, %v953
    %v955 = vrcp.pop %v901
    %v956 = vmul.f32 %v68, %v955
    %v957 = vrcp.pop %v902
    %v958 = vmul.f32 %v69, %v957
    %v959 = vrcp.pop %v903
    %v960 = vmul.f32 %v70, %v959
    %v961 = vrcp.pop %v904
    %v962 = vmul.f32 %v71, %v961
    %v963 = vrcp.pop %v905
    %v964 = vmul.f32 %v72, %v963
    %v965 = vrcp.pop %v906
    %v966 = vmul.f32 %v73, %v965
    %v967 = vrcp.pop %v907
    %v968 = vmul.f32 %v74, %v967
    %v969 = vrcp.pop %v908
    %v970 = vmul.f32 %v75, %v969
    %v971 = vrcp.pop %v909
    %v972 = vmul.f32 %v76, %v971
    %v973 = vrcp.pop %v910
    %v974 = vmul.f32 %v77, %v973
    %975 = vst.msk [vmem:[%s2] sm:$0xff] %vm110, %v464
    %976 = vst.msk [vmem:[%s2 + $0x8] sm:$0xff] %vm110, %v466
    %977 = vst.msk [vmem:[%s2 + $0x10] sm:$0xff] %vm110, %v468
    %978 = vst.msk [vmem:[%s2 + $0x18] sm:$0xff] %vm110, %v470
    %979 = vst.msk [vmem:[%s2 + $0x20] sm:$0xff] %vm110, %v472
    %980 = vst.msk [vmem:[%s2 + $0x28] sm:$0xff] %vm110, %v474
    %981 = vst.msk [vmem:[%s2 + $0x30] sm:$0xff] %vm110, %v476
    %982 = vst.msk [vmem:[%s2 + $0x38] sm:$0xff] %vm110, %v478
    %983 = vst.msk [vmem:[%s2 + $0x40] sm:$0xff] %vm110, %v480
    %984 = vst.msk [vmem:[%s2 + $0x48] sm:$0xff] %vm110, %v482
    %985 = vst.msk [vmem:[%s2 + $0x50] sm:$0xff] %vm110, %v484
    %986 = vst.msk [vmem:[%s2 + $0x58] sm:$0xff] %vm110, %v486
    %987 = vst.msk [vmem:[%s2 + $0x60] sm:$0xff] %vm110, %v488
    %988 = vst.msk [vmem:[%s2 + $0x68] sm:$0xff] %vm110, %v490
    %989 = vst.msk [vmem:[%s2 + $0x70] sm:$0xff] %vm110, %v492
    %990 = vst.msk [vmem:[%s2 + $0x78] sm:$0xff] %vm110, %v494
    %991 = vst.msk [vmem:[%s2 + $0x80] sm:$0xff] %vm110, %v496
    %992 = vst.msk [vmem:[%s2 + $0x88] sm:$0xff] %vm110, %v498
    %993 = vst.msk [vmem:[%s2 + $0x90] sm:$0xff] %vm110, %v500
    %994 = vst.msk [vmem:[%s2 + $0x98] sm:$0xff] %vm110, %v502
    %995 = vst.msk [vmem:[%s2 + $0xa0] sm:$0xff] %vm110, %v504
    %996 = vst.msk [vmem:[%s2 + $0xa8] sm:$0xff] %vm110, %v506
    %997 = vst.msk [vmem:[%s2 + $0xb0] sm:$0xff] %vm110, %v508
    %998 = vst.msk [vmem:[%s2 + $0xb8] sm:$0xff] %vm110, %v510
    %999 = vst.msk [vmem:[%s2 + $0xc0] sm:$0xff] %vm110, %v512
    %1000 = vst.msk [vmem:[%s2 + $0xc8] sm:$0xff] %vm110, %v514
    %1001 = vst.msk [vmem:[%s2 + $0xd0] sm:$0xff] %vm110, %v516
    %1002 = vst.msk [vmem:[%s2 + $0xd8] sm:$0xff] %vm110, %v518
    %1003 = vst.msk [vmem:[%s2 + $0xe0] sm:$0xff] %vm110, %v520
    %1004 = vst.msk [vmem:[%s2 + $0xe8] sm:$0xff] %vm110, %v522
    %1005 = vst.msk [vmem:[%s2 + $0xf0] sm:$0xff] %vm110, %v524
    %1006 = vst.msk [vmem:[%s2 + $0xf8] sm:$0xff] %vm110, %v526
    %s1007 = scalar_lea.vmem %s2, 256
    %1008 = vst.msk [vmem:[%s1007] sm:$0xff] %vm110, %v912
    %1009 = vst.msk [vmem:[%s1007 + $0x8] sm:$0xff] %vm110, %v914
    %1010 = vst.msk [vmem:[%s1007 + $0x10] sm:$0xff] %vm110, %v916
    %1011 = vst.msk [vmem:[%s1007 + $0x18] sm:$0xff] %vm110, %v918
    %1012 = vst.msk [vmem:[%s1007 + $0x20] sm:$0xff] %vm110, %v920
    %1013 = vst.msk [vmem:[%s1007 + $0x28] sm:$0xff] %vm110, %v922
    %1014 = vst.msk [vmem:[%s1007 + $0x30] sm:$0xff] %vm110, %v924
    %1015 = vst.msk [vmem:[%s1007 + $0x38] sm:$0xff] %vm110, %v926
    %1016 = vst.msk [vmem:[%s1007 + $0x40] sm:$0xff] %vm110, %v928
    %1017 = vst.msk [vmem:[%s1007 + $0x48] sm:$0xff] %vm110, %v930
    %1018 = vst.msk [vmem:[%s1007 + $0x50] sm:$0xff] %vm110, %v932
    %1019 = vst.msk [vmem:[%s1007 + $0x58] sm:$0xff] %vm110, %v934
    %1020 = vst.msk [vmem:[%s1007 + $0x60] sm:$0xff] %vm110, %v936
    %1021 = vst.msk [vmem:[%s1007 + $0x68] sm:$0xff] %vm110, %v938
    %1022 = vst.msk [vmem:[%s1007 + $0x70] sm:$0xff] %vm110, %v940
    %1023 = vst.msk [vmem:[%s1007 + $0x78] sm:$0xff] %vm110, %v942
    %1024 = vst.msk [vmem:[%s1007 + $0x80] sm:$0xff] %vm110, %v944
    %1025 = vst.msk [vmem:[%s1007 + $0x88] sm:$0xff] %vm110, %v946
    %1026 = vst.msk [vmem:[%s1007 + $0x90] sm:$0xff] %vm110, %v948
    %1027 = vst.msk [vmem:[%s1007 + $0x98] sm:$0xff] %vm110, %v950
    %1028 = vst.msk [vmem:[%s1007 + $0xa0] sm:$0xff] %vm110, %v952
    %1029 = vst.msk [vmem:[%s1007 + $0xa8] sm:$0xff] %vm110, %v954
    %1030 = vst.msk [vmem:[%s1007 + $0xb0] sm:$0xff] %vm110, %v956
    %1031 = vst.msk [vmem:[%s1007 + $0xb8] sm:$0xff] %vm110, %v958
    %1032 = vst.msk [vmem:[%s1007 + $0xc0] sm:$0xff] %vm110, %v960
    %1033 = vst.msk [vmem:[%s1007 + $0xc8] sm:$0xff] %vm110, %v962
    %1034 = vst.msk [vmem:[%s1007 + $0xd0] sm:$0xff] %vm110, %v964
    %1035 = vst.msk [vmem:[%s1007 + $0xd8] sm:$0xff] %vm110, %v966
    %1036 = vst.msk [vmem:[%s1007 + $0xe0] sm:$0xff] %vm110, %v968
    %1037 = vst.msk [vmem:[%s1007 + $0xe8] sm:$0xff] %vm110, %v970
    %1038 = vst.msk [vmem:[%s1007 + $0xf0] sm:$0xff] %vm110, %v972
    %1039 = vst.msk [vmem:[%s1007 + $0xf8] sm:$0xff] %vm110, %v974
    %v1040 = vmul.f32 %v464, %v912
    %v1041 = vmul.f32 %v466, %v914
    %v1042 = vmul.f32 %v468, %v916
    %v1043 = vmul.f32 %v470, %v918
    %v1044 = vmul.f32 %v472, %v920
    %v1045 = vmul.f32 %v474, %v922
    %v1046 = vmul.f32 %v476, %v924
    %v1047 = vmul.f32 %v478, %v926
    %v1048 = vmul.f32 %v480, %v928
    %v1049 = vmul.f32 %v482, %v930
    %v1050 = vmul.f32 %v484, %v932
    %v1051 = vmul.f32 %v486, %v934
    %v1052 = vmul.f32 %v488, %v936
    %v1053 = vmul.f32 %v490, %v938
    %v1054 = vmul.f32 %v492, %v940
    %v1055 = vmul.f32 %v494, %v942
    %v1056 = vmul.f32 %v496, %v944
    %v1057 = vmul.f32 %v498, %v946
    %v1058 = vmul.f32 %v500, %v948
    %v1059 = vmul.f32 %v502, %v950
    %v1060 = vmul.f32 %v504, %v952
    %v1061 = vmul.f32 %v506, %v954
    %v1062 = vmul.f32 %v508, %v956
    %v1063 = vmul.f32 %v510, %v958
    %v1064 = vmul.f32 %v512, %v960
    %v1065 = vmul.f32 %v514, %v962
    %v1066 = vmul.f32 %v516, %v964
    %v1067 = vmul.f32 %v518, %v966
    %v1068 = vmul.f32 %v520, %v968
    %v1069 = vmul.f32 %v522, %v970
    %v1070 = vmul.f32 %v524, %v972
    %v1071 = vmul.f32 %v526, %v974
    %v1072 = vsel %vm110, %v1040, 0.0
    %v1073 = vsel %vm110, %v1041, 0.0
    %v1074 = vadd.f32 %v1072, %v1073
    %v1075 = vsel %vm110, %v1042, 0.0
    %v1076 = vadd.f32 %v1074, %v1075
    %v1077 = vsel %vm110, %v1043, 0.0
    %v1078 = vadd.f32 %v1076, %v1077
    %v1079 = vsel %vm110, %v1044, 0.0
    %v1080 = vadd.f32 %v1078, %v1079
    %v1081 = vsel %vm110, %v1045, 0.0
    %v1082 = vadd.f32 %v1080, %v1081
    %v1083 = vsel %vm110, %v1046, 0.0
    %v1084 = vadd.f32 %v1082, %v1083
    %v1085 = vsel %vm110, %v1047, 0.0
    %v1086 = vadd.f32 %v1084, %v1085
    %v1087 = vsel %vm110, %v1048, 0.0
    %v1088 = vadd.f32 %v1086, %v1087
    %v1089 = vsel %vm110, %v1049, 0.0
    %v1090 = vadd.f32 %v1088, %v1089
    %v1091 = vsel %vm110, %v1050, 0.0
    %v1092 = vadd.f32 %v1090, %v1091
    %v1093 = vsel %vm110, %v1051, 0.0
    %v1094 = vadd.f32 %v1092, %v1093
    %v1095 = vsel %vm110, %v1052, 0.0
    %v1096 = vadd.f32 %v1094, %v1095
    %v1097 = vsel %vm110, %v1053, 0.0
    %v1098 = vadd.f32 %v1096, %v1097
    %v1099 = vsel %vm110, %v1054, 0.0
    %v1100 = vadd.f32 %v1098, %v1099
    %v1101 = vsel %vm110, %v1055, 0.0
    %v1102 = vadd.f32 %v1100, %v1101
    %v1103 = vsel %vm110, %v1056, 0.0
    %v1104 = vadd.f32 %v1102, %v1103
    %v1105 = vsel %vm110, %v1057, 0.0
    %v1106 = vadd.f32 %v1104, %v1105
    %v1107 = vsel %vm110, %v1058, 0.0
    %v1108 = vadd.f32 %v1106, %v1107
    %v1109 = vsel %vm110, %v1059, 0.0
    %v1110 = vadd.f32 %v1108, %v1109
    %v1111 = vsel %vm110, %v1060, 0.0
    %v1112 = vadd.f32 %v1110, %v1111
    %v1113 = vsel %vm110, %v1061, 0.0
    %v1114 = vadd.f32 %v1112, %v1113
    %v1115 = vsel %vm110, %v1062, 0.0
    %v1116 = vadd.f32 %v1114, %v1115
    %v1117 = vsel %vm110, %v1063, 0.0
    %v1118 = vadd.f32 %v1116, %v1117
    %v1119 = vsel %vm110, %v1064, 0.0
    %v1120 = vadd.f32 %v1118, %v1119
    %v1121 = vsel %vm110, %v1065, 0.0
    %v1122 = vadd.f32 %v1120, %v1121
    %v1123 = vsel %vm110, %v1066, 0.0
    %v1124 = vadd.f32 %v1122, %v1123
    %v1125 = vsel %vm110, %v1067, 0.0
    %v1126 = vadd.f32 %v1124, %v1125
    %v1127 = vsel %vm110, %v1068, 0.0
    %v1128 = vadd.f32 %v1126, %v1127
    %v1129 = vsel %vm110, %v1069, 0.0
    %v1130 = vadd.f32 %v1128, %v1129
    %v1131 = vsel %vm110, %v1070, 0.0
    %v1132 = vadd.f32 %v1130, %v1131
    %v1133 = vsel %vm110, %v1071, 0.0
    %v1134 = vadd.f32 %v1132, %v1133
    %1135 = vadd.xlane.f32.xlu0 %v1134
    %v1136 = vpop.xlane.xlu0 %1135
    %v1137 = vrot.slane %v1136, 4
    %v1138 = vadd.f32 %v1136, %v1137
    %v1139 = vrot.slane %v1138, 2
    %v1140 = vadd.f32 %v1138, %v1139
    %v1141 = vrot.slane %v1140, 1
    %v1142 = vadd.f32 %v1140, %v1141
    %s1143 = vtos %v1142
    %v1144 = vstv %s1143
    %1145 = vst [vmem:[#allocation2] sm:$0xff] %v1144
    // Predicated region
    $region10: #{tpu_custom_call.1} parent=1 // pred_check
      _
    $region11: #{tpu_custom_call.1} parent=1 // pred_check_branch
      %1147 = sbr.rel (0) target = $region13
    $region12: #{tpu_custom_call.1} parent=1 // pred_region
      _
    $region13: #{tpu_custom_call.1} parent=1 // pred_fallthru
      _
    // Predicated region
    $region14: #{tpu_custom_call.1} parent=1 // pred_check
      _
    $region15: #{tpu_custom_call.1} parent=1 // pred_check_branch
      %1149 = sbr.rel (0) target = $region17
    $region16: #{tpu_custom_call.1} parent=1 // pred_region
      %s1151 = ssub.s32 128, 128
      %1152 = vsyncadd [#allocation3], %s1151
      %s1154 = sshll.u32 [#allocation2], 4
      %s1155 = int_to_ptr.vmem [resolvable:$true] %s1154
      %1157 = dma.vmem_to_hbm [thread:$0]  %s1155, 128, %s3, [#allocation3]
    $region17: #{tpu_custom_call.1} parent=1 // pred_fallthru
      _
    // Predicated region
    $region18: #{tpu_custom_call.1} parent=1 // pred_check
      _
    $region19: #{tpu_custom_call.1} parent=1 // pred_check_branch
      %1159 = sbr.rel (0) target = $region21
    $region20: #{tpu_custom_call.1} parent=1 // pred_region
      _
    $region21: #{tpu_custom_call.1} parent=1 // pred_fallthru
      _
    // Predicated region
    $region22: #{tpu_custom_call.1} parent=1 // pred_check
      _
    $region23: #{tpu_custom_call.1} parent=1 // pred_check_branch
      %1161 = sbr.rel (0) target = $region25
    $region24: #{tpu_custom_call.1} parent=1 // pred_region
      %1162 = dma.done [#allocation3], 128
    $region25: #{tpu_custom_call.1} parent=1 // pred_fallthru
      _
    %1163 = vsyncpa [#allocation3], 1

</llo_original>
